<compile_context>
chip_gen: v7x
topology: tpu7x:2x2x1
jax: 0.10.0
libtpu: 0.0.40
codegen_flags: <defaults>
</compile_context>

<pallas_src>
import functools
import math

import jax
import jax.numpy as jnp
import numpy as np
from jax.experimental import pallas as pl
from jax.experimental.pallas import tpu as pltpu

_TARGET_BLOCK_BYTES = 2 * 1024 * 1024   # ~2 MiB output block: per-step overhead <10%;
                                        # double-buffered block + intermediates fit every
                                        # chip's default scoped VMEM (16/32 MiB).
_UNROLL_MAX = 8                         # unroll the per-camera loop up to this many cameras


def _choose_tiles(n_cams, render_size, target_bytes):
    """Pick (bn, row_tile): cameras per grid step and image rows per grid step."""
    R = render_size
    per_cam = 3 * R * R * 4
    if per_cam <= target_bytes:
        # Whole image per camera; pack cameras up to the byte budget.
        row_tile = R
        bn = max(1, min(n_cams, target_bytes // per_cam))
    else:
        bn = 1
        if R % 8 == 0:
            rows_budget = max(8, target_bytes // (3 * R * 4))
            row_tile = 8
            cand = 8
            while cand <= R:
                if R % cand == 0 and cand <= rows_budget:
                    row_tile = cand
                cand += 8
        else:
            # TODO(synk): pad the row axis to a multiple of 8 for non-multiple-of-8
            # render sizes whose full image exceeds the block budget.
            row_tile = R
    # v7x has 2 TensorCores: make sure there are >= 2 grid steps when possible.
    if math.ceil(n_cams / bn) * math.ceil(R / row_tile) < 2:
        if bn > 1:
            bn = (bn + 1) // 2
        elif row_tile == R and R % 16 == 0:
            row_tile = R // 2
    return bn, row_tile


def _ray_dirs_kernel(cam_ref, coef_ref, dirs_ref, *, n_total):
    """One grid step handles `bn` cameras x (row_tile x R) pixels.

    cam_ref:  SMEM (N*9,) flattened per-camera rotation coefficients
              [C[c,0], -C[c,1], -C[c,2]] for c in 0..2 (opencv->blender flip folded in).
    coef_ref: SMEM (2,)  [ 1/(render_size*focal), 0.5*render_size - 0.5 ].
    dirs_ref: VMEM out block (bn*3, row_tile, R): camera-major, then the 3 direction
              components, then (image row, image col) — lane-dense on columns.
    """
    bn3, row_tile, R = dirs_ref.shape
    bn = bn3 // 3
    nb = pl.program_id(0)
    rt = pl.program_id(1)

    s = coef_ref[0]        # 1 / (R * focal)
    c0 = coef_ref[1]       # 0.5 * R - 0.5

    # Dense (row_tile, R) index tiles: no div/mod, full (8,128) vreg utilization.
    jj = jax.lax.broadcasted_iota(jnp.int32, (row_tile, R), 1).astype(jnp.float32)
    ii = (rt * row_tile
          + jax.lax.broadcasted_iota(jnp.int32, (row_tile, R), 0)).astype(jnp.float32)
    # Folded pixel -> camera-space lift (single FMA per axis), shared by all cameras.
    x_lift = (jj - c0) * s
    y_lift = (ii - c0) * s

    def one_camera(b):
        n_idx = nb * bn + b
        if n_total % bn:                       # clamp only when batch blocks can pad
            n_idx = jnp.minimum(n_idx, n_total - 1)
        base = n_idx * 9
        d = []
        for c in range(3):
            a = cam_ref[base + 3 * c + 0]      #  C[c,0]
            g = cam_ref[base + 3 * c + 1]      # -C[c,1]
            e = cam_ref[base + 3 * c + 2]      # -C[c,2]
            d.append(x_lift * a + y_lift * g + e)
        # 1 / max(||d||, 1e-12) == rsqrt(max(||d||^2, 1e-24)); single EUP op.
        inv = jax.lax.rsqrt(
            jnp.maximum(d[0] * d[0] + d[1] * d[1] + d[2] * d[2], 1e-24))
        for c in range(3):
            dirs_ref[b * 3 + c] = d[c] * inv   # dense full-slab store

    if bn <= _UNROLL_MAX:
        for b in range(bn):                    # static unroll (static SMEM/store offsets)
            one_camera(b)
    else:
        @pl.loop(0, bn)                        # many-camera / tiny-image packing path
        def _(b):
            one_camera(b)


def ray_generator(cam2world_matrix, fov, render_size, *, channels_last=True,
                  target_block_bytes=_TARGET_BLOCK_BYTES, bn=None, row_tile=None):
    """Pallas equivalent of RayGenerator.forward.

    cam2world_matrix: (N, 4, 4) float32
    fov: scalar (degrees)
    render_size: int
    returns (ray_origins, ray_dirs); (N, M, 3) when channels_last (PyTorch convention),
    (N, 3, M) lane-dense when channels_last=False (skips the extra transpose pass).
    """
    cam = jnp.asarray(cam2world_matrix, jnp.float32)
    N = cam.shape[0]
    R = int(render_size)
    M = R * R

    # FOV_to_intrinsics: fx = fy = 0.5 / tan(deg2rad(fov)/2); cx = cy = 0.5; skew = 0.
    focal = 0.5 / jnp.tan(jnp.deg2rad(jnp.asarray(fov, jnp.float32)) * 0.5)
    coef = jnp.stack([
        jnp.asarray(1.0, jnp.float32) / (jnp.float32(R) * focal),
        jnp.asarray(0.5 * R - 0.5, jnp.float32),
    ]).astype(jnp.float32)

    # Per-camera coefficients with the opencv->blender column flip folded in.
    flip = jnp.asarray([1.0, -1.0, -1.0], jnp.float32)
    cam_coef = (cam[:, :3, :3] * flip[None, None, :]).reshape(N * 9)
    cam_loc = cam[:, :3, 3]

    auto_bn, auto_rt = _choose_tiles(N, R, int(target_block_bytes))
    bn = auto_bn if bn is None else int(bn)
    row_tile = auto_rt if row_tile is None else int(row_tile)
    assert row_tile == R or row_tile % 8 == 0, "row_tile must be a multiple of 8 or == R"

    n_blocks = pl.cdiv(N, bn)
    row_tiles = pl.cdiv(R, row_tile)

    kernel = functools.partial(_ray_dirs_kernel, n_total=N)

    dirs_flat = pl.pallas_call(
        kernel,
        grid=(n_blocks, row_tiles),
        in_specs=[
            pl.BlockSpec(memory_space=pltpu.MemorySpace.SMEM),   # cam_coef (N*9,)
            pl.BlockSpec(memory_space=pltpu.MemorySpace.SMEM),   # coef (2,)
        ],
        out_specs=pl.BlockSpec((bn * 3, row_tile, R), lambda nb, rt: (nb, rt, 0)),
        out_shape=jax.ShapeDtypeStruct((N * 3, R, R), jnp.float32),
        compiler_params=pltpu.CompilerParams(
            dimension_semantics=("parallel", "parallel"),
            vmem_limit_bytes=32 * 1024 * 1024),
    )(cam_coef, coef)

    dirs = dirs_flat.reshape(N, 3, M)          # contiguous metadata reshape (free)
    if channels_last:
        # PyTorch module convention (N, M, 3).  The transpose is a separate XLA pass;
        # TPU consumers that accept channels-first should pass channels_last=False.
        ray_dirs = jnp.transpose(dirs, (0, 2, 1))
        ray_origins = jnp.broadcast_to(cam_loc[:, None, :], (N, M, 3))
    else:
        ray_dirs = dirs
        ray_origins = jnp.broadcast_to(cam_loc[:, :, None], (N, 3, M))
    return ray_origins, ray_dirs


def ray_generator_ref(cam, fov, R):
    """Pure-JAX reference mirroring the PyTorch module."""
    N = cam.shape[0]
    focal = 0.5 / jnp.tan(jnp.deg2rad(jnp.asarray(fov, jnp.float32)) * 0.5)
    i, j = jnp.meshgrid(jnp.arange(R, dtype=jnp.float32),
                        jnp.arange(R, dtype=jnp.float32), indexing="ij")
    x_cam = (j.reshape(-1) + 0.5) / R
    y_cam = (i.reshape(-1) + 0.5) / R
    x_lift = (x_cam - 0.5) / focal
    y_lift = (y_cam - 0.5) / focal
    ones = jnp.ones_like(x_lift)
    pts = jnp.stack([x_lift, y_lift, ones, ones], axis=-1)            # (M, 4)
    flipm = jnp.diag(jnp.array([1.0, -1.0, -1.0, 1.0], jnp.float32))
    cam_b = cam @ flipm                                               # (N, 4, 4)
    world = jnp.einsum("nij,mj->nmi", cam_b, pts)[:, :, :3]           # (N, M, 3)
    cam_loc = cam[:, :3, 3]
    dirs = world - cam_loc[:, None, :]
    dirs = dirs / jnp.maximum(jnp.linalg.norm(dirs, axis=2, keepdims=True), 1e-12)
    origins = jnp.broadcast_to(cam_loc[:, None, :], (N, dirs.shape[1], 3))
    return origins, dirs


if __name__ == "__main__":
    key = jax.random.PRNGKey(0)
    fov = 49.0

    def make_cams(n, k):
        # Deterministic "camera poses": random 3x4 upper part, bottom row [0,0,0,1].
        top = jax.random.normal(k, (n, 3, 4), dtype=jnp.float32)
        bottom = jnp.broadcast_to(
            jnp.array([[0.0, 0.0, 0.0, 1.0]], jnp.float32)[None], (n, 1, 4))
        return jnp.concatenate([top, bottom], axis=1)                 # (n, 4, 4)

    k1, k2, k3 = jax.random.split(key, 3)

    def check(cam, R, **kw):
        o, d = ray_generator(cam, fov, R, **kw)
        o = jax.block_until_ready(o)
        d = jax.block_until_ready(d)
        ref_o, ref_d = ray_generator_ref(cam, fov, R)
        np.testing.assert_allclose(np.asarray(o), np.asarray(ref_o),
                                   rtol=1e-5, atol=1e-5)
        np.testing.assert_allclose(np.asarray(d), np.asarray(ref_d),
                                   rtol=1e-5, atol=1e-5)
        return o, d

    # 1) Small power-of-two image, two cameras (auto tiles -> bn=1, 2 batch steps).
    cam2 = make_cams(2, k1)
    o, d = check(cam2, 16)
    assert o.shape == (2, 256, 3) and d.shape == (2, 256, 3)

    # 2) Forced row tiling (row_tile=8 -> 2 row tiles): exercises the ii program_id offset.
    check(cam2, 16, row_tile=8, bn=1)

    # 3) Many cameras on a tiny image: budget-driven bn packs >8 cameras per grid step
    #    (exercises the in-kernel scf.for per-camera path).
    cam20 = make_cams(20, k2)
    check(cam20, 16)

    # 4) Batch not divisible by bn (partial last batch block + camera-index clamp).
    cam5 = make_cams(5, k3)
    check(cam5, 16, bn=2)

    # 5) Non power-of-two render size (row_tile == full-dim path, no div/mod anywhere).
    check(cam2, 12)

    # 6) Channels-first (lane-dense, no transpose) output path.
    o_cf, d_cf = ray_generator(cam2, fov, 16, channels_last=False)
    d_cf = jax.block_until_ready(d_cf)
    _, ref_d = ray_generator_ref(cam2, fov, 16)
    np.testing.assert_allclose(np.asarray(jnp.transpose(d_cf, (0, 2, 1))),
                               np.asarray(ref_d), rtol=1e-5, atol=1e-5)

    print("KERNEL_OK")
</pallas_src>

<mosaic_0001>
module attributes {stable_mosaic.version = 11 : i64} {
  func.func @_ray_dirs_kernel(%arg0: i32, %arg1: i32, %arg2: memref<18xf32, #tpu.memory_space<smem>>, %arg3: memref<2xf32, #tpu.memory_space<smem>>, %arg4: memref<3x16x16xf32, #tpu.memory_space<vmem>>) attributes {dimension_semantics = [#tpu.dimension_semantics<parallel>, #tpu.dimension_semantics<parallel>], iteration_bounds = array<i64: 2, 1>, scalar_prefetch = 0 : i64, scratch_operands = 0 : i64, tpu.core_type = #tpu.core_type<tc>, window_params = [{transform_indices = @transform_0, window_bounds = array<i64: 18>}, {transform_indices = @transform_1, window_bounds = array<i64: 2>}, {transform_indices = @transform_2, window_bounds = array<i64: 3, 16, 16>}]} {
    %c0 = arith.constant 0 : index
    %0 = memref.load %arg3[%c0] : memref<2xf32, #tpu.memory_space<smem>>
    %c1 = arith.constant 1 : index
    %1 = memref.load %arg3[%c1] : memref<2xf32, #tpu.memory_space<smem>>
    %2 = tpu.iota {dimensions = array<i32: 1>} : vector<16x16xi32>
    %3 = arith.sitofp %2 : vector<16x16xi32> to vector<16x16xf32>
    %c16_i32 = arith.constant 16 : i32
    %4 = arith.muli %arg1, %c16_i32 : i32
    %5 = tpu.iota {dimensions = array<i32: 0>} : vector<16x16xi32>
    %6 = vector.broadcast %4 : i32 to vector<16x16xi32>
    %7 = arith.addi %6, %5 : vector<16x16xi32>
    %8 = arith.sitofp %7 : vector<16x16xi32> to vector<16x16xf32>
    %9 = vector.broadcast %1 : f32 to vector<16x16xf32>
    %10 = arith.subf %3, %9 : vector<16x16xf32>
    %11 = vector.broadcast %0 : f32 to vector<16x16xf32>
    %12 = arith.mulf %10, %11 : vector<16x16xf32>
    %13 = vector.broadcast %1 : f32 to vector<16x16xf32>
    %14 = arith.subf %8, %13 : vector<16x16xf32>
    %15 = vector.broadcast %0 : f32 to vector<16x16xf32>
    %16 = arith.mulf %14, %15 : vector<16x16xf32>
    %c1_i32 = arith.constant 1 : i32
    %17 = arith.muli %arg0, %c1_i32 : i32
    %c0_i32 = arith.constant 0 : i32
    %18 = arith.addi %17, %c0_i32 : i32
    %c9_i32 = arith.constant 9 : i32
    %19 = arith.muli %18, %c9_i32 : i32
    %c0_i32_0 = arith.constant 0 : i32
    %20 = arith.addi %19, %c0_i32_0 : i32
    %c0_i32_1 = arith.constant 0 : i32
    %21 = arith.addi %20, %c0_i32_1 : i32
    %22 = arith.index_cast %21 : i32 to index
    %23 = memref.load %arg2[%22] : memref<18xf32, #tpu.memory_space<smem>>
    %c0_i32_2 = arith.constant 0 : i32
    %24 = arith.addi %19, %c0_i32_2 : i32
    %c1_i32_3 = arith.constant 1 : i32
    %25 = arith.addi %24, %c1_i32_3 : i32
    %26 = arith.index_cast %25 : i32 to index
    %27 = memref.load %arg2[%26] : memref<18xf32, #tpu.memory_space<smem>>
    %c0_i32_4 = arith.constant 0 : i32
    %28 = arith.addi %19, %c0_i32_4 : i32
    %c2_i32 = arith.constant 2 : i32
    %29 = arith.addi %28, %c2_i32 : i32
    %30 = arith.index_cast %29 : i32 to index
    %31 = memref.load %arg2[%30] : memref<18xf32, #tpu.memory_space<smem>>
    %32 = vector.broadcast %23 : f32 to vector<16x16xf32>
    %33 = arith.mulf %12, %32 : vector<16x16xf32>
    %34 = vector.broadcast %27 : f32 to vector<16x16xf32>
    %35 = arith.mulf %16, %34 : vector<16x16xf32>
    %36 = arith.addf %33, %35 : vector<16x16xf32>
    %37 = vector.broadcast %31 : f32 to vector<16x16xf32>
    %38 = arith.addf %36, %37 : vector<16x16xf32>
    %c3_i32 = arith.constant 3 : i32
    %39 = arith.addi %19, %c3_i32 : i32
    %c0_i32_5 = arith.constant 0 : i32
    %40 = arith.addi %39, %c0_i32_5 : i32
    %41 = arith.index_cast %40 : i32 to index
    %42 = memref.load %arg2[%41] : memref<18xf32, #tpu.memory_space<smem>>
    %c3_i32_6 = arith.constant 3 : i32
    %43 = arith.addi %19, %c3_i32_6 : i32
    %c1_i32_7 = arith.constant 1 : i32
    %44 = arith.addi %43, %c1_i32_7 : i32
    %45 = arith.index_cast %44 : i32 to index
    %46 = memref.load %arg2[%45] : memref<18xf32, #tpu.memory_space<smem>>
    %c3_i32_8 = arith.constant 3 : i32
    %47 = arith.addi %19, %c3_i32_8 : i32
    %c2_i32_9 = arith.constant 2 : i32
    %48 = arith.addi %47, %c2_i32_9 : i32
    %49 = arith.index_cast %48 : i32 to index
    %50 = memref.load %arg2[%49] : memref<18xf32, #tpu.memory_space<smem>>
    %51 = vector.broadcast %42 : f32 to vector<16x16xf32>
    %52 = arith.mulf %12, %51 : vector<16x16xf32>
    %53 = vector.broadcast %46 : f32 to vector<16x16xf32>
    %54 = arith.mulf %16, %53 : vector<16x16xf32>
    %55 = arith.addf %52, %54 : vector<16x16xf32>
    %56 = vector.broadcast %50 : f32 to vector<16x16xf32>
    %57 = arith.addf %55, %56 : vector<16x16xf32>
    %c6_i32 = arith.constant 6 : i32
    %58 = arith.addi %19, %c6_i32 : i32
    %c0_i32_10 = arith.constant 0 : i32
    %59 = arith.addi %58, %c0_i32_10 : i32
    %60 = arith.index_cast %59 : i32 to index
    %61 = memref.load %arg2[%60] : memref<18xf32, #tpu.memory_space<smem>>
    %c6_i32_11 = arith.constant 6 : i32
    %62 = arith.addi %19, %c6_i32_11 : i32
    %c1_i32_12 = arith.constant 1 : i32
    %63 = arith.addi %62, %c1_i32_12 : i32
    %64 = arith.index_cast %63 : i32 to index
    %65 = memref.load %arg2[%64] : memref<18xf32, #tpu.memory_space<smem>>
    %c6_i32_13 = arith.constant 6 : i32
    %66 = arith.addi %19, %c6_i32_13 : i32
    %c2_i32_14 = arith.constant 2 : i32
    %67 = arith.addi %66, %c2_i32_14 : i32
    %68 = arith.index_cast %67 : i32 to index
    %69 = memref.load %arg2[%68] : memref<18xf32, #tpu.memory_space<smem>>
    %70 = vector.broadcast %61 : f32 to vector<16x16xf32>
    %71 = arith.mulf %12, %70 : vector<16x16xf32>
    %72 = vector.broadcast %65 : f32 to vector<16x16xf32>
    %73 = arith.mulf %16, %72 : vector<16x16xf32>
    %74 = arith.addf %71, %73 : vector<16x16xf32>
    %75 = vector.broadcast %69 : f32 to vector<16x16xf32>
    %76 = arith.addf %74, %75 : vector<16x16xf32>
    %77 = arith.mulf %38, %38 : vector<16x16xf32>
    %78 = arith.mulf %57, %57 : vector<16x16xf32>
    %79 = arith.addf %77, %78 : vector<16x16xf32>
    %80 = arith.mulf %76, %76 : vector<16x16xf32>
    %81 = arith.addf %79, %80 : vector<16x16xf32>
    %cst = arith.constant 1.000000e-24 : f32
    %82 = vector.broadcast %cst : f32 to vector<16x16xf32>
    %83 = arith.maximumf %81, %82 : vector<16x16xf32>
    %84 = math.rsqrt %83 : vector<16x16xf32>
    %85 = arith.mulf %38, %84 : vector<16x16xf32>
    %c0_15 = arith.constant 0 : index
    %c0_16 = arith.constant 0 : index
    %c0_17 = arith.constant 0 : index
    %86 = vector.load %arg4[%c0_15, %c0_16, %c0_17] : memref<3x16x16xf32, #tpu.memory_space<vmem>>, vector<1x16x16xf32>
    %87 = vector.shape_cast %86 : vector<1x16x16xf32> to vector<16x16xf32>
    %88 = vector.shape_cast %85 : vector<16x16xf32> to vector<1x16x16xf32>
    tpu.vector_store %arg4[%c0_15, %c0_16, %c0_17], %88 {strides = array<i32>} : memref<3x16x16xf32, #tpu.memory_space<vmem>>, vector<1x16x16xf32>,
    %89 = arith.mulf %57, %84 : vector<16x16xf32>
    %c1_18 = arith.constant 1 : index
    %c0_19 = arith.constant 0 : index
    %c0_20 = arith.constant 0 : index
    %90 = vector.load %arg4[%c1_18, %c0_19, %c0_20] : memref<3x16x16xf32, #tpu.memory_space<vmem>>, vector<1x16x16xf32>
    %91 = vector.shape_cast %90 : vector<1x16x16xf32> to vector<16x16xf32>
    %92 = vector.shape_cast %89 : vector<16x16xf32> to vector<1x16x16xf32>
    tpu.vector_store %arg4[%c1_18, %c0_19, %c0_20], %92 {strides = array<i32>} : memref<3x16x16xf32, #tpu.memory_space<vmem>>, vector<1x16x16xf32>,
    %93 = arith.mulf %76, %84 : vector<16x16xf32>
    %c2 = arith.constant 2 : index
    %c0_21 = arith.constant 0 : index
    %c0_22 = arith.constant 0 : index
    %94 = vector.load %arg4[%c2, %c0_21, %c0_22] : memref<3x16x16xf32, #tpu.memory_space<vmem>>, vector<1x16x16xf32>
    %95 = vector.shape_cast %94 : vector<1x16x16xf32> to vector<16x16xf32>
    %96 = vector.shape_cast %93 : vector<16x16xf32> to vector<1x16x16xf32>
    tpu.vector_store %arg4[%c2, %c0_21, %c0_22], %96 {strides = array<i32>} : memref<3x16x16xf32, #tpu.memory_space<vmem>>, vector<1x16x16xf32>,
    return
  }
  func.func @transform_0(%arg0: i32, %arg1: i32) -> i32 {
    %c0_i32 = arith.constant 0 : i32
    %c0_i32_0 = arith.constant 0 : i32
    return %c0_i32 : i32
  }
  func.func @transform_1(%arg0: i32, %arg1: i32) -> i32 {
    %c0_i32 = arith.constant 0 : i32
    %c0_i32_0 = arith.constant 0 : i32
    return %c0_i32 : i32
  }
  func.func @transform_2(%arg0: i32, %arg1: i32) -> (i32, i32, i32) {
    %c0_i32 = arith.constant 0 : i32
    %c0_i32_0 = arith.constant 0 : i32
    return %arg0, %arg1, %c0_i32 : i32, i32, i32
  }
}

</mosaic_0001>

<llo_original>
// kernel: tpu_custom_call.1
$region0: #{tpu_custom_call.1}
  #allocation0 [shape = 'u32[]', space=smem, size = 0x4, offset = 0x4, fixed_abs, tag = 'smem constant byte address 0x4 - core index']
  #allocation1 [shape = 'u32[144,128]{1,0:T(1,128)}', space=vmem, size = 0x12000, scoped, tag = 'internal scratch']
  %s0 = inlined_call_operand.hbm [shape: f32[18], index: 0, kind: input, shape index: {}]
  %s1 = inlined_call_operand.vmem [shape: f32[2], index: 1, kind: input, shape index: {}]
  %s2 = inlined_call_operand.hbm [shape: f32[6,16,16], index: 2, kind: output, shape index: {}]
  %s3 = sld [smem:[#allocation0]]
  $region49: #{tpu_custom_call.1} parent=0
    _
  %s5 = ssub.s32 1, %s3
  %s6 = scalar_select 0, %s5, %s3
  $region1: #{tpu_custom_call.1} parent=0
    #allocation2 [shape = 'u8[512]{0}', space=smem, size = 0x200, scoped, tag = 'input window, operand 0, single buffered']
    #allocation3 [shape = 's32[2]{0}', space=sflag, size = 0x8, scoped, tag = 'scoped memory for tpu_custom_call.1']
    #allocation4 [shape = 's32[2]{0}', space=sflag, size = 0x8, scoped, tag = 'scoped memory for tpu_custom_call.1']
    #allocation5 [shape = 's32[2]{0}', space=sflag, size = 0x8, scoped, tag = 'scoped memory for tpu_custom_call.1']
    #allocation6 [shape = 'u8[512]{0}', space=smem, size = 0x200, scoped, tag = 'input window, operand 1, single buffered']
    #allocation7 [shape = 'u8[49152]{0}', space=vmem, size = 0xc000, scoped, tag = 'output window, operand 0']
    %7 = vsyncpa [#allocation4], 0
    %8 = vsyncpa [#allocation5], 0
    %9 = vsyncpa [#allocation3], 0
    %s10 = scalar_lea.sflag [#allocation3], 1
    %11 = vsyncpa %s10, 0
    loop: start=0, step=1, limit=4
    $region2: #{tpu_custom_call.1} parent=1 // loop_pre_header
      _
    $region3: #{tpu_custom_call.1} parent=1 // loop_header
      %s13 = sphi 0, %s17
      %p14 = scmp.ge.s32.totalorder %s13, 4
      %s20 = sphi 0, %s32
      %s21 = sphi 0, %s28
      %s22 = sphi 0, %s20
      %s23 = sphi 0, %s21
      %s24 = sphi 0, %s22
      %s25 = sphi 0, %s23
      %s33 = sphi 0, %s33
      %s35 = sphi 0, %s33
      %s36 = sphi 0, %s35
      %s50 = sphi 0, %s36
      %s54 = sphi 0, %s54
      %s56 = sphi 0, %s54
      %s57 = sphi 0, %s56
      %s71 = sphi 0, %s57
      %s79 = sphi 0, %s81
      %s82 = sphi 0, %s79
      %s83 = sphi 0, %s82
      %s99 = sphi 0, %s83
    $region4: #{tpu_custom_call.1} parent=1 // loop_header_branch
      %16 = sbr.rel (%p14) target = $region8
    $region5: #{tpu_custom_call.1} parent=1 // loop_body
      %s18 = ssub.s32 %s13, 1
      %s19 = ssub.s32 %s13, 2
      %s26 = sadd.s32 1, %s21
      %p27 = scmp.ge.s32.totalorder %s26, 1
      %s28 = scalar_select %p27, 0, %s26
      %s29 = sadd.s32 1, %s20
      %s30 = scalar_select %p27, %s29, %s20
      %p31 = scmp.ge.s32.totalorder %s30, 2
      %s32 = scalar_select %p31, 0, %s30
      %s34 = sadd.s32 %s33, 1
      %p37 = scmp.eq.s32.totalorder %s13, 1
      %p38 = scmp.ne.s32.totalorder %s33, %s35
      %p39 = scmp.eq.s32.totalorder %s13, 0
      %p40 = por %p38, %p39
      %p41 = scmp.ne.s32.totalorder %s33, %s35
      %p42 = scmp.eq.s32.totalorder %s18, 1
      %p43 = por %p41, %p42
      %p44 = scmp.ne.s32.totalorder %s35, %s36
      %p45 = scmp.eq.s32.totalorder %s18, 0
      %p46 = por %p44, %p45
      %p47 = scmp.ne.s32.totalorder %s35, %s36
      %p48 = scmp.eq.s32.totalorder %s19, 1
      %p49 = por %p47, %p48
      %p51 = scmp.ne.s32.totalorder %s36, %s50
      %p52 = scmp.eq.s32.totalorder %s19, 0
      %p53 = por %p51, %p52
      %s55 = sadd.s32 %s54, 1
      %p58 = scmp.eq.s32.totalorder %s13, 1
      %p59 = scmp.ne.s32.totalorder %s54, %s56
      %p60 = scmp.eq.s32.totalorder %s13, 0
      %p61 = por %p59, %p60
      %p62 = scmp.ne.s32.totalorder %s54, %s56
      %p63 = scmp.eq.s32.totalorder %s18, 1
      %p64 = por %p62, %p63
      %p65 = scmp.ne.s32.totalorder %s56, %s57
      %p66 = scmp.eq.s32.totalorder %s18, 0
      %p67 = por %p65, %p66
      %p68 = scmp.ne.s32.totalorder %s56, %s57
      %p69 = scmp.eq.s32.totalorder %s19, 1
      %p70 = por %p68, %p69
      %p72 = scmp.ne.s32.totalorder %s57, %s71
      %p73 = scmp.eq.s32.totalorder %s19, 0
      %p74 = por %p72, %p73
      %s75 = ssub.s32 %s20, %s32
      %s76 = ssub.s32 %s21, %s28
      %s77 = sor.u32 %s75, %s76
      %p78 = scmp.eq.s32.totalorder %s77, 0
      %s80 = sadd.s32 %s79, 1
      %s81 = scalar_select %p78, %s79, %s80
      %p84 = pneg %p78
      %p85 = scmp.eq.s32.totalorder %s13, 1
      %p86 = por %p84, %p85
      %p87 = scmp.ne.s32.totalorder %s79, %s82
      %p88 = scmp.eq.s32.totalorder %s13, 0
      %p89 = por %p87, %p88
      %p90 = scmp.ne.s32.totalorder %s79, %s82
      %p91 = scmp.eq.s32.totalorder %s18, 1
      %p92 = por %p90, %p91
      %p93 = scmp.ne.s32.totalorder %s82, %s83
      %p94 = scmp.eq.s32.totalorder %s18, 0
      %p95 = por %p93, %p94
      %p96 = scmp.ne.s32.totalorder %s82, %s83
      %p97 = scmp.eq.s32.totalorder %s19, 1
      %p98 = por %p96, %p97
      %p100 = scmp.ne.s32.totalorder %s83, %s99
      %p101 = scmp.eq.s32.totalorder %s19, 0
      %p102 = por %p100, %p101
      %p103 = scmp.le.s32.totalorder 1, %s13
      %p104 = scmp.lt.s32.totalorder %s13, 3
      %p105 = pnand %p103, %p104
      %p106 = pneg %p105
      // Predicated region
      $region9: #{tpu_custom_call.1} parent=5 // pred_check
        _
      $region10: #{tpu_custom_call.1} parent=5 // pred_check_branch
        %108 = sbr.rel (%p105) target = $region12
      $region11: #{tpu_custom_call.1} parent=5 // pred_region
        %s109 = ssub.s32 %s13, 1
        // Predicated region
        $region13: #{tpu_custom_call.1} parent=11 // pred_check
          %p110 = pneg %p46
        $region14: #{tpu_custom_call.1} parent=11 // pred_check_branch
          %112 = sbr.rel (%p110) target = $region16
        $region15: #{tpu_custom_call.1} parent=11 // pred_region
          %s114 = ssub.s32 16, 16
          %115 = vsyncadd [#allocation4], %s114
          %118 = dma.hbm_to_smem %s0, 16, [#allocation2], [#allocation4]
        $region16: #{tpu_custom_call.1} parent=11 // pred_fallthru
          _
        // Predicated region
        $region17: #{tpu_custom_call.1} parent=11 // pred_check
          %p119 = pneg %p67
        $region18: #{tpu_custom_call.1} parent=11 // pred_check_branch
          %121 = sbr.rel (%p119) target = $region20
        $region19: #{tpu_custom_call.1} parent=11 // pred_region
          %s123 = ssub.s32 16, 16
          %124 = vsyncadd [#allocation5], %s123
          %s126 = sshll.u32 %s1, 4
          %s127 = int_to_ptr.vmem [resolvable:$true] %s126
          %129 = dma.vmem_to_smem %s127, 16, [#allocation6], [#allocation5]
        $region20: #{tpu_custom_call.1} parent=11 // pred_fallthru
          _
      $region12: #{tpu_custom_call.1} parent=5 // pred_fallthru
        _
      %p130 = scmp.lt.s32.totalorder %s13, 2
      // Predicated region
      $region21: #{tpu_custom_call.1} parent=5 // pred_check
        %p131 = pneg %p130
      $region22: #{tpu_custom_call.1} parent=5 // pred_check_branch
        %133 = sbr.rel (%p131) target = $region24
      $region23: #{tpu_custom_call.1} parent=5 // pred_region
        _
      $region24: #{tpu_custom_call.1} parent=5 // pred_fallthru
        _
      %p134 = scmp.le.s32.totalorder 1, %s13
      %p135 = scmp.lt.s32.totalorder %s13, 3
      %p136 = pnand %p134, %p135
      %p137 = pneg %p136
      // Predicated region
      $region25: #{tpu_custom_call.1} parent=5 // pred_check
        _
      $region26: #{tpu_custom_call.1} parent=5 // pred_check_branch
        %139 = sbr.rel (%p136) target = $region28
      $region27: #{tpu_custom_call.1} parent=5 // pred_region
        %s140 = ssub.s32 %s13, 1
        // Predicated region
        $region29: #{tpu_custom_call.1} parent=27 // pred_check
          %p141 = pneg %p46
        $region30: #{tpu_custom_call.1} parent=27 // pred_check_branch
          %143 = sbr.rel (%p141) target = $region32
        $region31: #{tpu_custom_call.1} parent=27 // pred_region
          %144 = dma.done [#allocation4], 16
        $region32: #{tpu_custom_call.1} parent=27 // pred_fallthru
          _
        // Predicated region
        $region33: #{tpu_custom_call.1} parent=27 // pred_check
          %p145 = pneg %p67
        $region34: #{tpu_custom_call.1} parent=27 // pred_check_branch
          %147 = sbr.rel (%p145) target = $region36
        $region35: #{tpu_custom_call.1} parent=27 // pred_region
          %148 = dma.done [#allocation5], 16
        $region36: #{tpu_custom_call.1} parent=27 // pred_fallthru
          _
        %149 = sfence
        %p150 = pneg %p46
        %p151 = pneg %p43
        %p152 = pneg %p67
        %p153 = pneg %p64
        %p154 = pneg %p95
        %p155 = pneg %p92
        %s156 = sand.u32 %s82, 1
        %s157 = scalar_lea.sflag [#allocation3], %s156
        %s158 = sand.u32 %s82, 1
        %s159 = smul.addr %s158, 48
        %s160 = scalar_lea.vmem [#allocation7], %s159
        %s161 = smul.u32 3, %s22
        %s162 = smul.u32 2, %s23
        %s163 = sld [smem:[#allocation6]]
        %s164 = sld [smem:[#allocation6 + $0x1]]
        %v165 = vlaneseq
        %v166 = vand.u32 %v165, 127
        %v167 = vcvt.s32.f32 %v166
        %s168 = smul.u32 %s23, 16
        %v169 = vlaneseq
        %v170 = vshrl.u32 %v169, 7
        %v171 = vadd.s32 %v170, 8
        %v172 = vstv %s168
        %v173 = vadd.s32 %v172, %v170
        %v174 = vadd.s32 %v172, %v171
        %v175 = vcvt.s32.f32 %v173
        %v176 = vcvt.s32.f32 %v174
        %v177 = vstv %s164
        %v178 = vsub.f32 %v167, %v177
        %v179 = vstv %s163
        %v180 = vmul.f32 %v178, %v179
        %v181 = vsub.f32 %v175, %v177
        %v182 = vsub.f32 %v176, %v177
        %v183 = vmul.f32 %v181, %v179
        %v184 = vmul.f32 %v182, %v179
        %s185 = smul.u32 %s22, 9
        %s186 = sld [smem:[#allocation2 + %s185]]
        %s187 = sadd.s32 %s185, 1
        %s188 = sld [smem:[#allocation2 + %s187]]
        %s189 = sadd.s32 %s185, 2
        %s190 = sld [smem:[#allocation2 + %s189]]
        %v191 = vstv %s186
        %v192 = vmul.f32 %v180, %v191
        %v193 = vstv %s188
        %v194 = vmul.f32 %v183, %v193
        %v195 = vmul.f32 %v184, %v193
        %v196 = vadd.f32 %v192, %v194
        %v197 = vadd.f32 %v192, %v195
        %v198 = vstv %s190
        %v199 = vadd.f32 %v196, %v198
        %v200 = vadd.f32 %v197, %v198
        %s201 = sadd.s32 %s185, 3
        %s202 = sld [smem:[#allocation2 + %s201]]
        %s203 = sadd.s32 %s185, 4
        %s204 = sld [smem:[#allocation2 + %s203]]
        %s205 = sadd.s32 %s185, 5
        %s206 = sld [smem:[#allocation2 + %s205]]
        %v207 = vstv %s202
        %v208 = vmul.f32 %v180, %v207
        %v209 = vstv %s204
        %v210 = vmul.f32 %v183, %v209
        %v211 = vmul.f32 %v184, %v209
        %v212 = vadd.f32 %v208, %v210
        %v213 = vadd.f32 %v208, %v211
        %v214 = vstv %s206
        %v215 = vadd.f32 %v212, %v214
        %v216 = vadd.f32 %v213, %v214
        %s217 = sadd.s32 %s185, 6
        %s218 = sld [smem:[#allocation2 + %s217]]
        %s219 = sadd.s32 %s185, 7
        %s220 = sld [smem:[#allocation2 + %s219]]
        %s221 = sadd.s32 %s185, 8
        %s222 = sld [smem:[#allocation2 + %s221]]
        %v223 = vstv %s218
        %v224 = vmul.f32 %v180, %v223
        %v225 = vstv %s220
        %v226 = vmul.f32 %v183, %v225
        %v227 = vmul.f32 %v184, %v225
        %v228 = vadd.f32 %v224, %v226
        %v229 = vadd.f32 %v224, %v227
        %v230 = vstv %s222
        %v231 = vadd.f32 %v228, %v230
        %v232 = vadd.f32 %v229, %v230
        %v233 = vmul.f32 %v199, %v199
        %v234 = vmul.f32 %v200, %v200
        %v235 = vmul.f32 %v215, %v215
        %v236 = vmul.f32 %v216, %v216
        %v237 = vadd.f32 %v233, %v235
        %v238 = vadd.f32 %v234, %v236
        %v239 = vmul.f32 %v231, %v231
        %v240 = vmul.f32 %v232, %v232
        %v241 = vadd.f32 %v237, %v239
        %v242 = vadd.f32 %v238, %v240
        %v243 = vmax.f32 %v241, 1e-24
        %v244 = vmax.f32 %v242, 1e-24
        %v245 = vrsqrt.pop %v243
        %v246 = vrsqrt.pop %v244
        %v247 = vmul.f32 %v199, %v245
        %v248 = vmul.f32 %v200, %v246
        %vm249 = vcmask 130048
        %250 = vst.msk [vmem:[%s160] sm:$0xff] %vm249, %v247
        %251 = vst.msk [vmem:[%s160 + $0x8] sm:$0xff] %vm249, %v248
        %v252 = vmul.f32 %v215, %v245
        %v253 = vmul.f32 %v216, %v246
        %s254 = scalar_lea.vmem %s160, 16 [#allocation7]
        %255 = vst.msk [vmem:[%s254] sm:$0xff] %vm249, %v252
        %256 = vst.msk [vmem:[%s254 + $0x8] sm:$0xff] %vm249, %v253
        %v257 = vmul.f32 %v231, %v245
        %v258 = vmul.f32 %v232, %v246
        %s259 = scalar_lea.vmem %s160, 32 [#allocation7]
        %260 = vst.msk [vmem:[%s259] sm:$0xff] %vm249, %v257
        %261 = vst.msk [vmem:[%s259 + $0x8] sm:$0xff] %vm249, %v258
        %s262 = sand.u32 %s82, 1
        %s263 = scalar_lea.sflag [#allocation3], %s262
        %s264 = sand.u32 %s82, 1
        %s265 = smul.addr %s264, 48
        %s266 = scalar_lea.vmem [#allocation7], %s265
        // Predicated region
        $region37: #{tpu_custom_call.1} parent=27 // pred_check
          %p267 = pneg %p92
        $region38: #{tpu_custom_call.1} parent=27 // pred_check_branch
          %269 = sbr.rel (%p267) target = $region40
        $region39: #{tpu_custom_call.1} parent=27 // pred_region
          %s270 = smul.u32 3, %s22
          %s271 = smul.u32 2, %s23
          %s273 = ssub.s32 768, 768
          %274 = vsyncadd %s263, %s273
          %s275 = smul.addr %s270, 2
          %s276 = sadd.s32 %s271, %s275
          %s277 = smul.addr %s276, 128
          %s278 = scalar_lea.hbm %s2, %s277
          %s279 = sshll.u32 %s266, 4
          %s280 = int_to_ptr.vmem [resolvable:$true] %s279
          %285 = dma.vmem_to_hbm [thread:$0]  %s280, 768, %s278, %s263, 128, 128, 8
        $region40: #{tpu_custom_call.1} parent=27 // pred_fallthru
          _
      $region28: #{tpu_custom_call.1} parent=5 // pred_fallthru
        _
      %p286 = scmp.le.s32.totalorder 2, %s13
      // Predicated region
      $region41: #{tpu_custom_call.1} parent=5 // pred_check
        %p287 = pneg %p286
      $region42: #{tpu_custom_call.1} parent=5 // pred_check_branch
        %289 = sbr.rel (%p287) target = $region44
      $region43: #{tpu_custom_call.1} parent=5 // pred_region
        %s290 = ssub.s32 %s13, 2
        // Predicated region
        $region45: #{tpu_custom_call.1} parent=43 // pred_check
          %p291 = pneg %p98
        $region46: #{tpu_custom_call.1} parent=43 // pred_check_branch
          %293 = sbr.rel (%p291) target = $region48
        $region47: #{tpu_custom_call.1} parent=43 // pred_region
          %s294 = sand.u32 %s83, 1
          %s295 = scalar_lea.sflag [#allocation3], %s294
          %s296 = sand.u32 %s83, 1
          %s297 = smul.addr %s296, 48
          %s298 = scalar_lea.vmem [#allocation7], %s297
          %299 = dma.done %s295, 768
        $region48: #{tpu_custom_call.1} parent=43 // pred_fallthru
          _
      $region44: #{tpu_custom_call.1} parent=5 // pred_fallthru
        _
    $region6: #{tpu_custom_call.1} parent=1 // loop_footer
      %s17 = sadd.s32 1, %s13
    $region7: #{tpu_custom_call.1} parent=1 // loop_footer_branch
      %12 = sbr.rel target = $region3
    $region8: #{tpu_custom_call.1} parent=1 // loop_exit
      _
    %300 = vsyncpa [#allocation3], 1
    %s301 = scalar_lea.sflag [#allocation3], 1
    %302 = vsyncpa %s301, 1
    %303 = vsyncpa [#allocation4], 1
    %s304 = scalar_lea.sflag [#allocation4], 1
    %305 = vsyncpa %s304, 1
    %306 = vsyncpa [#allocation5], 1
    %s307 = scalar_lea.sflag [#allocation5], 1
    %308 = vsyncpa %s307, 1

</llo_original>
